<compile_context>
chip_gen: v7x
topology: tpu7x:2x2x1
jax: 0.10.0
libtpu: 0.0.40
codegen_flags: <defaults>
</compile_context>

<pallas_src>
import functools

import jax
import jax.numpy as jnp
from jax.experimental import pallas as pl
from jax.experimental.pallas import tpu as pltpu


def _round_up(x, m):
    return (x + m - 1) // m * m


def _vmem_budget_bytes():
    """~3/4 of physical VMEM (≈96 MiB on v5e/v6e, ≈48 MiB on v7x)."""
    phys = 64 * 1024 * 1024                      # conservative v7x floor
    try:
        phys = int(getattr(pltpu.get_tpu_info(), "vmem_capacity_bytes", phys))
    except Exception:
        pass
    return max(32 * 1024 * 1024, (phys * 3) // 4)


def _lstm_cell_math(gates, c_prev, hp):
    """f32 gate nonlinearities + state update; Hp-aligned gate slices."""
    i_g = jax.nn.sigmoid(gates[:, 0 * hp:1 * hp])
    f_g = jax.nn.sigmoid(gates[:, 1 * hp:2 * hp])
    g_g = jnp.tanh(gates[:, 2 * hp:3 * hp])
    o_g = jax.nn.sigmoid(gates[:, 3 * hp:4 * hp])
    c_new = f_g * c_prev + i_g * g_g
    h_new = o_g * jnp.tanh(c_new)
    return h_new, c_new


# --------------------------------------------------------------------------
# Kernel A: resident weights, single grid step, unrolled layer loop.
# --------------------------------------------------------------------------
def _resident_lstm_kernel(x_ref, w_ref, s_ref, b_ref, h0_ref, c0_ref,
                          out_ref, xh_buf, *, num_layers, hid_pad, x_width):
    dp, hp = x_width, hid_pad

    # Seed the x slot once (lane-aligned full-width store, cast to bf16 here).
    xh_buf[:, :dp] = x_ref[...].astype(jnp.bfloat16)

    def layer_body(l, carry):
        # h slot: this layer's initial hidden state (aligned 128k-wide store).
        xh_buf[:, dp:] = h0_ref[l].astype(jnp.bfloat16)
        # int8 weights -> bf16; single fused MXU dot, f32 accumulation.
        w_bf = w_ref[l].astype(jnp.bfloat16)                    # (Dp+Hp, 4Hp)
        raw = jnp.dot(xh_buf[...], w_bf,
                      preferred_element_type=jnp.float32)       # (B, 4Hp)
        gates = raw * s_ref[l] + b_ref[l]                       # dequant + bias
        h_new, c_new = _lstm_cell_math(gates, c0_ref[l], hp)
        # Combined lane-dense [h | c] writeback for this layer.
        out_ref[l] = jnp.concatenate([h_new, c_new], axis=-1)
        # Next layer's input x = this layer's h (aligned store; stale columns
        # beyond Hp only ever meet zero-quantized weight rows).
        xh_buf[:, :hp] = h_new.astype(jnp.bfloat16)
        return carry

    jax.lax.fori_loop(0, num_layers, layer_body, 0, unroll=True)


# --------------------------------------------------------------------------
# Kernel B: streamed weights, one LSTM layer per grid step.
# --------------------------------------------------------------------------
def _stream_lstm_kernel(x_ref, w_ref, s_ref, b_ref, h0_ref, c0_ref,
                        out_ref, xh_buf, *, hid_pad, x_width):
    dp, hp = x_width, hid_pad
    layer = pl.program_id(0)

    @pl.when(layer == 0)
    def _():
        xh_buf[:, :dp] = x_ref[...].astype(jnp.bfloat16)

    xh_buf[:, dp:] = h0_ref[0].astype(jnp.bfloat16)

    w_bf = w_ref[0].astype(jnp.bfloat16)
    raw = jnp.dot(xh_buf[...], w_bf, preferred_element_type=jnp.float32)
    gates = raw * s_ref[0] + b_ref[0]
    h_new, c_new = _lstm_cell_math(gates, c0_ref[0], hp)
    out_ref[0] = jnp.concatenate([h_new, c_new], axis=-1)

    @pl.when(layer + 1 < pl.num_programs(0))
    def _():
        xh_buf[:, :hp] = h_new.astype(jnp.bfloat16)


# --------------------------------------------------------------------------
# Host-side weight packing (one-time): transpose, pad rows to Dp/Hp, pad each
# gate's columns to stride Hp, fuse biases, int8 symmetric per-column quant.
# --------------------------------------------------------------------------
def _pack_lstm_params(params, hid_dim, hid_pad, x_width):
    H, Hp, Dp = hid_dim, hid_pad, x_width
    w_list, b_list = [], []
    for p in params:
        d_l = p['w_ih'].shape[1]
        w_x = jnp.zeros((Dp, 4 * H), jnp.float32).at[:d_l, :].set(p['w_ih'].T)
        w_h = jnp.zeros((Hp, 4 * H), jnp.float32).at[:H, :].set(p['w_hh'].T)
        w = jnp.concatenate([w_x, w_h], axis=0)                 # (Dp+Hp, 4H)
        w = jnp.pad(w.reshape(Dp + Hp, 4, H),
                    ((0, 0), (0, 0), (0, Hp - H))).reshape(Dp + Hp, 4 * Hp)
        b = jnp.pad((p['b_ih'] + p['b_hh']).reshape(4, H),
                    ((0, 0), (0, Hp - H))).reshape(1, 4 * Hp)
        w_list.append(w)
        b_list.append(b)
    w_f32 = jnp.stack(w_list)                                   # (L, Dp+Hp, 4Hp)
    b_cat = jnp.stack(b_list).astype(jnp.float32)               # (L, 1, 4Hp)
    # Symmetric (zero-point-free) per-output-channel int8 quantization.
    amax = jnp.max(jnp.abs(w_f32), axis=1, keepdims=True)       # (L, 1, 4Hp)
    scale = jnp.maximum(amax, 1e-8) / 127.0
    w_q = jnp.round(w_f32 / scale).astype(jnp.int8)             # (L, Dp+Hp, 4Hp)
    return w_q, scale.astype(jnp.float32), b_cat


def stacked_rnn_forward(inp, hidden, params, force_streaming=False):
    """One forward step of StackedRNN (cell='LSTM', dropout=0.0, eval mode).

    inp:    (B, in_dim) float32
    hidden: (h_0, c_0), each (L, B, H) float32
    params: list of L dicts {'w_ih': (4H, d_l), 'w_hh': (4H, H),
                             'b_ih': (4H,), 'b_hh': (4H,)}  (torch LSTMCell)
    returns: output (B, H), (h_n, c_n) each (L, B, H)
    """
    h_0, c_0 = hidden
    L, B, H = h_0.shape
    in_dim = inp.shape[1]
    Hp = _round_up(H, 128)                     # lane-aligned gate stride
    Dp = _round_up(max(in_dim, H), 128)        # lane-aligned x-slot width

    w_q, w_scale, b_cat = _pack_lstm_params(params, H, Hp, Dp)

    x_pad = jnp.zeros((B, Dp), jnp.float32).at[:, :in_dim].set(inp)
    h0p = jnp.pad(h_0.astype(jnp.float32), ((0, 0), (0, 0), (0, Hp - H)))
    c0p = jnp.pad(c_0.astype(jnp.float32), ((0, 0), (0, 0), (0, Hp - H)))

    budget = _vmem_budget_bytes()
    resident_bytes = (w_q.size                       # int8 weights
                      + (w_scale.size + b_cat.size) * 4
                      + (x_pad.size + h0p.size + c0p.size) * 4
                      + L * B * 2 * Hp * 4           # combined output
                      + B * (Dp + Hp) * 2)           # bf16 scratch
    use_resident = (not force_streaming) and (2 * resident_bytes <= budget)
    vmem_limit = int(budget)

    out_shape = jax.ShapeDtypeStruct((L, B, 2 * Hp), jnp.float32)
    scratch = [pltpu.VMEM((B, Dp + Hp), jnp.bfloat16)]          # [x | h], bf16
    cparams = pltpu.CompilerParams(dimension_semantics=("arbitrary",),
                                   vmem_limit_bytes=vmem_limit)

    if use_resident:
        kernel = functools.partial(_resident_lstm_kernel,
                                   num_layers=L, hid_pad=Hp, x_width=Dp)
        out_hc = pl.pallas_call(
            kernel,
            out_shape=out_shape,
            grid_spec=pltpu.PrefetchScalarGridSpec(
                num_scalar_prefetch=0,
                grid=(1,),
                in_specs=[
                    pl.BlockSpec((B, Dp), lambda i: (0, 0)),
                    pl.BlockSpec((L, Dp + Hp, 4 * Hp), lambda i: (0, 0, 0)),
                    pl.BlockSpec((L, 1, 4 * Hp), lambda i: (0, 0, 0)),
                    pl.BlockSpec((L, 1, 4 * Hp), lambda i: (0, 0, 0)),
                    pl.BlockSpec((L, B, Hp), lambda i: (0, 0, 0)),
                    pl.BlockSpec((L, B, Hp), lambda i: (0, 0, 0)),
                ],
                out_specs=pl.BlockSpec((L, B, 2 * Hp), lambda i: (0, 0, 0)),
                scratch_shapes=scratch,
            ),
            compiler_params=cparams,
        )(x_pad, w_q, w_scale, b_cat, h0p, c0p)
    else:
        kernel = functools.partial(_stream_lstm_kernel, hid_pad=Hp, x_width=Dp)
        out_hc = pl.pallas_call(
            kernel,
            out_shape=out_shape,
            grid_spec=pltpu.PrefetchScalarGridSpec(
                num_scalar_prefetch=0,
                grid=(L,),
                in_specs=[
                    pl.BlockSpec((B, Dp), lambda l: (0, 0)),
                    pl.BlockSpec((1, Dp + Hp, 4 * Hp), lambda l: (l, 0, 0)),
                    pl.BlockSpec((1, 1, 4 * Hp), lambda l: (l, 0, 0)),
                    pl.BlockSpec((1, 1, 4 * Hp), lambda l: (l, 0, 0)),
                    pl.BlockSpec((1, B, Hp), lambda l: (l, 0, 0)),
                    pl.BlockSpec((1, B, Hp), lambda l: (l, 0, 0)),
                ],
                out_specs=pl.BlockSpec((1, B, 2 * Hp), lambda l: (l, 0, 0)),
                scratch_shapes=scratch,
            ),
            compiler_params=cparams,
        )(x_pad, w_q, w_scale, b_cat, h0p, c0p)

    h_n = out_hc[:, :, :H]
    c_n = out_hc[:, :, Hp:Hp + H]
    output = h_n[-1]          # module's `output` is the last layer's hidden
    return output, (h_n, c_n)


# --------------------------------------------------------------------------
# References
# --------------------------------------------------------------------------
def _reference_forward(inp, hidden, params):
    """Pure-JAX stacked torch-LSTMCell semantics (f32 throughout)."""
    h_0, c_0 = hidden
    L, B, H = h_0.shape
    x = inp
    h_list, c_list = [], []
    for l, p in enumerate(params):
        gates = x @ p['w_ih'].T + p['b_ih'] + h_0[l] @ p['w_hh'].T + p['b_hh']
        i_g = jax.nn.sigmoid(gates[:, 0 * H:1 * H])
        f_g = jax.nn.sigmoid(gates[:, 1 * H:2 * H])
        g_g = jnp.tanh(gates[:, 2 * H:3 * H])
        o_g = jax.nn.sigmoid(gates[:, 3 * H:4 * H])
        c_new = f_g * c_0[l] + i_g * g_g
        h_new = o_g * jnp.tanh(c_new)
        h_list.append(h_new)
        c_list.append(c_new)
        x = h_new
    return x, (jnp.stack(h_list), jnp.stack(c_list))


def _fake_quant_params(params):
    """Apply the kernel's int8 per-output-channel weight rounding to params."""
    out = []
    for p in params:
        w_cat = jnp.concatenate([p['w_ih'], p['w_hh']], axis=1)   # (4H, d+H)
        amax = jnp.max(jnp.abs(w_cat), axis=1, keepdims=True)     # (4H, 1)
        scale = jnp.maximum(amax, 1e-8) / 127.0
        q = lambda w: jnp.round(w / scale) * scale
        out.append(dict(w_ih=q(p['w_ih']), w_hh=q(p['w_hh']),
                        b_ih=p['b_ih'], b_hh=p['b_hh']))
    return out


if __name__ == "__main__":
    num_layers = 2
    batch = 2
    in_dim = 24
    hid_dim = 32

    key = jax.random.PRNGKey(0)
    keys = jax.random.split(key, 4 * num_layers + 3)
    bound = float(hid_dim) ** -0.5   # torch LSTMCell init: U(-1/sqrt(H), 1/sqrt(H))

    params = []
    k = 0
    for l in range(num_layers):
        d_l = in_dim if l == 0 else hid_dim
        params.append(dict(
            w_ih=jax.random.uniform(keys[k + 0], (4 * hid_dim, d_l),
                                    jnp.float32, -bound, bound),
            w_hh=jax.random.uniform(keys[k + 1], (4 * hid_dim, hid_dim),
                                    jnp.float32, -bound, bound),
            b_ih=jax.random.uniform(keys[k + 2], (4 * hid_dim,),
                                    jnp.float32, -bound, bound),
            b_hh=jax.random.uniform(keys[k + 3], (4 * hid_dim,),
                                    jnp.float32, -bound, bound),
        ))
        k += 4

    inp = jax.random.normal(keys[k + 0], (batch, in_dim), jnp.float32)
    h_0 = jax.random.normal(keys[k + 1], (num_layers, batch, hid_dim),
                            jnp.float32)
    c_0 = jax.random.normal(keys[k + 2], (num_layers, batch, hid_dim),
                            jnp.float32)

    # Primary (resident-weights) path.
    out, (h_n, c_n) = stacked_rnn_forward(inp, (h_0, c_0), params)
    jax.block_until_ready((out, h_n, c_n))

    # Streaming fallback path (grid over layers), same inputs.
    out_s, (h_s, c_s) = stacked_rnn_forward(inp, (h_0, c_0), params,
                                            force_streaming=True)
    jax.block_until_ready((out_s, h_s, c_s))

    # Reference with the same int8-rounded weights (isolates the kernel's
    # bf16 activation rounding), plus a loose check against true f32 LSTM.
    fq_params = _fake_quant_params(params)
    ref_out, (ref_h, ref_c) = _reference_forward(inp, (h_0, c_0), fq_params)
    f32_out, (f32_h, f32_c) = _reference_forward(inp, (h_0, c_0), params)

    for got, want in ((out, ref_out), (h_n, ref_h), (c_n, ref_c)):
        assert jnp.allclose(got, want, atol=2e-2, rtol=2e-2)
    for got, want in ((out, f32_out), (h_n, f32_h), (c_n, f32_c)):
        assert jnp.allclose(got, want, atol=5e-2, rtol=5e-2)
    for got, want in ((out_s, out), (h_s, h_n), (c_s, c_n)):
        assert jnp.allclose(got, want, atol=1e-4, rtol=1e-4)

    print("KERNEL_OK")
</pallas_src>

<mosaic_0001>
module attributes {stable_mosaic.version = 11 : i64} {
  func.func @_resident_lstm_kernel(%arg0: i32, %arg1: memref<2x128xf32, #tpu.memory_space<vmem>>, %arg2: memref<2x256x512xi8, #tpu.memory_space<vmem>>, %arg3: memref<2x1x512xf32, #tpu.memory_space<vmem>>, %arg4: memref<2x1x512xf32, #tpu.memory_space<vmem>>, %arg5: memref<2x2x128xf32, #tpu.memory_space<vmem>>, %arg6: memref<2x2x128xf32, #tpu.memory_space<vmem>>, %arg7: memref<2x2x256xf32, #tpu.memory_space<vmem>>, %arg8: memref<2x256xbf16, #tpu.memory_space<vmem>>) attributes {dimension_semantics = [#tpu.dimension_semantics<arbitrary>], iteration_bounds = array<i64: 1>, scalar_prefetch = 0 : i64, scratch_operands = 1 : i64, tpu.core_type = #tpu.core_type<tc>, window_params = [{pipeline_mode = #tpu.pipeline_mode<synchronous>, transform_indices = @transform_0, window_bounds = array<i64: 2, 128>}, {pipeline_mode = #tpu.pipeline_mode<synchronous>, transform_indices = @transform_1, window_bounds = array<i64: 2, 256, 512>}, {pipeline_mode = #tpu.pipeline_mode<synchronous>, transform_indices = @transform_2, window_bounds = array<i64: 2, 1, 512>}, {pipeline_mode = #tpu.pipeline_mode<synchronous>, transform_indices = @transform_3, window_bounds = array<i64: 2, 1, 512>}, {pipeline_mode = #tpu.pipeline_mode<synchronous>, transform_indices = @transform_4, window_bounds = array<i64: 2, 2, 128>}, {pipeline_mode = #tpu.pipeline_mode<synchronous>, transform_indices = @transform_5, window_bounds = array<i64: 2, 2, 128>}, {pipeline_mode = #tpu.pipeline_mode<synchronous>, transform_indices = @transform_6, window_bounds = array<i64: 2, 2, 256>}]} {
    %c0 = arith.constant 0 : index
    %c0_0 = arith.constant 0 : index
    %0 = vector.load %arg1[%c0, %c0_0] : memref<2x128xf32, #tpu.memory_space<vmem>>, vector<2x128xf32>
    %1 = arith.truncf %0 : vector<2x128xf32> to vector<2x128xbf16>
    %c0_1 = arith.constant 0 : index
    %c0_2 = arith.constant 0 : index
    %2 = vector.load %arg8[%c0_1, %c0_2] : memref<2x256xbf16, #tpu.memory_space<vmem>>, vector<2x128xbf16>
    tpu.vector_store %arg8[%c0_1, %c0_2], %1 {strides = array<i32>} : memref<2x256xbf16, #tpu.memory_space<vmem>>, vector<2x128xbf16>,
    %c0_i32 = arith.constant 0 : i32
    %3 = arith.index_cast %c0_i32 : i32 to index
    %c0_3 = arith.constant 0 : index
    %c0_4 = arith.constant 0 : index
    %4 = vector.load %arg5[%3, %c0_3, %c0_4] : memref<2x2x128xf32, #tpu.memory_space<vmem>>, vector<1x2x128xf32>
    %5 = vector.shape_cast %4 : vector<1x2x128xf32> to vector<2x128xf32>
    %6 = arith.truncf %5 : vector<2x128xf32> to vector<2x128xbf16>
    %c0_5 = arith.constant 0 : index
    %c128 = arith.constant 128 : index
    %7 = vector.load %arg8[%c0_5, %c128] : memref<2x256xbf16, #tpu.memory_space<vmem>>, vector<2x128xbf16>
    tpu.vector_store %arg8[%c0_5, %c128], %6 {strides = array<i32>} : memref<2x256xbf16, #tpu.memory_space<vmem>>, vector<2x128xbf16>,
    %8 = arith.index_cast %c0_i32 : i32 to index
    %c0_6 = arith.constant 0 : index
    %c0_7 = arith.constant 0 : index
    %9 = vector.load %arg2[%8, %c0_6, %c0_7] : memref<2x256x512xi8, #tpu.memory_space<vmem>>, vector<1x256x512xi8>
    %10 = vector.shape_cast %9 : vector<1x256x512xi8> to vector<256x512xi8>
    %11 = arith.sitofp %10 : vector<256x512xi8> to vector<256x512xbf16>
    %c0_8 = arith.constant 0 : index
    %c0_9 = arith.constant 0 : index
    %12 = vector.load %arg8[%c0_8, %c0_9] : memref<2x256xbf16, #tpu.memory_space<vmem>>, vector<2x256xbf16>
    %cst = arith.constant dense<0.000000e+00> : vector<2x512xf32>
    %13 = tpu.matmul %12, %11, %cst {dimension_numbers = #tpu.dot_dimension_numbers<[1], [0], [0], [1], [0, 0, 1, 1], [], []>} : vector<2x256xbf16>, vector<256x512xbf16>, vector<2x512xf32> -> vector<2x512xf32>
    %14 = arith.index_cast %c0_i32 : i32 to index
    %c0_10 = arith.constant 0 : index
    %c0_11 = arith.constant 0 : index
    %15 = vector.load %arg3[%14, %c0_10, %c0_11] : memref<2x1x512xf32, #tpu.memory_space<vmem>>, vector<1x1x512xf32>
    %16 = vector.shape_cast %15 : vector<1x1x512xf32> to vector<1x512xf32>
    %17 = vector.broadcast %16 : vector<1x512xf32> to vector<2x512xf32>
    %18 = arith.mulf %13, %17 : vector<2x512xf32>
    %19 = arith.index_cast %c0_i32 : i32 to index
    %c0_12 = arith.constant 0 : index
    %c0_13 = arith.constant 0 : index
    %20 = vector.load %arg4[%19, %c0_12, %c0_13] : memref<2x1x512xf32, #tpu.memory_space<vmem>>, vector<1x1x512xf32>
    %21 = vector.shape_cast %20 : vector<1x1x512xf32> to vector<1x512xf32>
    %22 = vector.broadcast %21 : vector<1x512xf32> to vector<2x512xf32>
    %23 = arith.addf %18, %22 : vector<2x512xf32>
    %24 = arith.index_cast %c0_i32 : i32 to index
    %c0_14 = arith.constant 0 : index
    %c0_15 = arith.constant 0 : index
    %25 = vector.load %arg6[%24, %c0_14, %c0_15] : memref<2x2x128xf32, #tpu.memory_space<vmem>>, vector<1x2x128xf32>
    %26 = vector.shape_cast %25 : vector<1x2x128xf32> to vector<2x128xf32>
    %27 = vector.extract_strided_slice %23 {offsets = [0, 0], sizes = [2, 128], strides = [1, 1]} : vector<2x512xf32> to vector<2x128xf32>
    %28 = arith.negf %27 : vector<2x128xf32>
    %29 = math.exp %28 : vector<2x128xf32>
    %cst_16 = arith.constant 1.000000e+00 : f32
    %30 = vector.broadcast %cst_16 : f32 to vector<2x128xf32>
    %31 = arith.addf %30, %29 : vector<2x128xf32>
    %32 = arith.divf %30, %31 : vector<2x128xf32>
    %33 = vector.extract_strided_slice %23 {offsets = [0, 128], sizes = [2, 128], strides = [1, 1]} : vector<2x512xf32> to vector<2x128xf32>
    %34 = arith.negf %33 : vector<2x128xf32>
    %35 = math.exp %34 : vector<2x128xf32>
    %cst_17 = arith.constant 1.000000e+00 : f32
    %36 = vector.broadcast %cst_17 : f32 to vector<2x128xf32>
    %37 = arith.addf %36, %35 : vector<2x128xf32>
    %38 = arith.divf %36, %37 : vector<2x128xf32>
    %39 = vector.extract_strided_slice %23 {offsets = [0, 256], sizes = [2, 128], strides = [1, 1]} : vector<2x512xf32> to vector<2x128xf32>
    %40 = math.tanh %39 : vector<2x128xf32>
    %41 = vector.extract_strided_slice %23 {offsets = [0, 384], sizes = [2, 128], strides = [1, 1]} : vector<2x512xf32> to vector<2x128xf32>
    %42 = arith.negf %41 : vector<2x128xf32>
    %43 = math.exp %42 : vector<2x128xf32>
    %cst_18 = arith.constant 1.000000e+00 : f32
    %44 = vector.broadcast %cst_18 : f32 to vector<2x128xf32>
    %45 = arith.addf %44, %43 : vector<2x128xf32>
    %46 = arith.divf %44, %45 : vector<2x128xf32>
    %47 = arith.mulf %38, %26 : vector<2x128xf32>
    %48 = arith.mulf %32, %40 : vector<2x128xf32>
    %49 = arith.addf %47, %48 : vector<2x128xf32>
    %50 = math.tanh %49 : vector<2x128xf32>
    %51 = arith.mulf %46, %50 : vector<2x128xf32>
    %52 = tpu.concatenate %51, %49 in 1 : vector<2x128xf32>, vector<2x128xf32> -> vector<2x256xf32>
    %53 = arith.index_cast %c0_i32 : i32 to index
    %c0_19 = arith.constant 0 : index
    %c0_20 = arith.constant 0 : index
    %54 = vector.load %arg7[%53, %c0_19, %c0_20] : memref<2x2x256xf32, #tpu.memory_space<vmem>>, vector<1x2x256xf32>
    %55 = vector.shape_cast %54 : vector<1x2x256xf32> to vector<2x256xf32>
    %56 = vector.shape_cast %52 : vector<2x256xf32> to vector<1x2x256xf32>
    tpu.vector_store %arg7[%53, %c0_19, %c0_20], %56 {strides = array<i32>} : memref<2x2x256xf32, #tpu.memory_space<vmem>>, vector<1x2x256xf32>,
    %57 = arith.truncf %51 : vector<2x128xf32> to vector<2x128xbf16>
    %c0_21 = arith.constant 0 : index
    %c0_22 = arith.constant 0 : index
    %58 = vector.load %arg8[%c0_21, %c0_22] : memref<2x256xbf16, #tpu.memory_space<vmem>>, vector<2x128xbf16>
    tpu.vector_store %arg8[%c0_21, %c0_22], %57 {strides = array<i32>} : memref<2x256xbf16, #tpu.memory_space<vmem>>, vector<2x128xbf16>,
    %c1_i32 = arith.constant 1 : i32
    %59 = arith.index_cast %c1_i32 : i32 to index
    %c0_23 = arith.constant 0 : index
    %c0_24 = arith.constant 0 : index
    %60 = vector.load %arg5[%59, %c0_23, %c0_24] : memref<2x2x128xf32, #tpu.memory_space<vmem>>, vector<1x2x128xf32>
    %61 = vector.shape_cast %60 : vector<1x2x128xf32> to vector<2x128xf32>
    %62 = arith.truncf %61 : vector<2x128xf32> to vector<2x128xbf16>
    %c0_25 = arith.constant 0 : index
    %c128_26 = arith.constant 128 : index
    %63 = vector.load %arg8[%c0_25, %c128_26] : memref<2x256xbf16, #tpu.memory_space<vmem>>, vector<2x128xbf16>
    tpu.vector_store %arg8[%c0_25, %c128_26], %62 {strides = array<i32>} : memref<2x256xbf16, #tpu.memory_space<vmem>>, vector<2x128xbf16>,
    %64 = arith.index_cast %c1_i32 : i32 to index
    %c0_27 = arith.constant 0 : index
    %c0_28 = arith.constant 0 : index
    %65 = vector.load %arg2[%64, %c0_27, %c0_28] : memref<2x256x512xi8, #tpu.memory_space<vmem>>, vector<1x256x512xi8>
    %66 = vector.shape_cast %65 : vector<1x256x512xi8> to vector<256x512xi8>
    %67 = arith.sitofp %66 : vector<256x512xi8> to vector<256x512xbf16>
    %c0_29 = arith.constant 0 : index
    %c0_30 = arith.constant 0 : index
    %68 = vector.load %arg8[%c0_29, %c0_30] : memref<2x256xbf16, #tpu.memory_space<vmem>>, vector<2x256xbf16>
    %cst_31 = arith.constant dense<0.000000e+00> : vector<2x512xf32>
    %69 = tpu.matmul %68, %67, %cst_31 {dimension_numbers = #tpu.dot_dimension_numbers<[1], [0], [0], [1], [0, 0, 1, 1], [], []>} : vector<2x256xbf16>, vector<256x512xbf16>, vector<2x512xf32> -> vector<2x512xf32>
    %70 = arith.index_cast %c1_i32 : i32 to index
    %c0_32 = arith.constant 0 : index
    %c0_33 = arith.constant 0 : index
    %71 = vector.load %arg3[%70, %c0_32, %c0_33] : memref<2x1x512xf32, #tpu.memory_space<vmem>>, vector<1x1x512xf32>
    %72 = vector.shape_cast %71 : vector<1x1x512xf32> to vector<1x512xf32>
    %73 = vector.broadcast %72 : vector<1x512xf32> to vector<2x512xf32>
    %74 = arith.mulf %69, %73 : vector<2x512xf32>
    %75 = arith.index_cast %c1_i32 : i32 to index
    %c0_34 = arith.constant 0 : index
    %c0_35 = arith.constant 0 : index
    %76 = vector.load %arg4[%75, %c0_34, %c0_35] : memref<2x1x512xf32, #tpu.memory_space<vmem>>, vector<1x1x512xf32>
    %77 = vector.shape_cast %76 : vector<1x1x512xf32> to vector<1x512xf32>
    %78 = vector.broadcast %77 : vector<1x512xf32> to vector<2x512xf32>
    %79 = arith.addf %74, %78 : vector<2x512xf32>
    %80 = arith.index_cast %c1_i32 : i32 to index
    %c0_36 = arith.constant 0 : index
    %c0_37 = arith.constant 0 : index
    %81 = vector.load %arg6[%80, %c0_36, %c0_37] : memref<2x2x128xf32, #tpu.memory_space<vmem>>, vector<1x2x128xf32>
    %82 = vector.shape_cast %81 : vector<1x2x128xf32> to vector<2x128xf32>
    %83 = vector.extract_strided_slice %79 {offsets = [0, 0], sizes = [2, 128], strides = [1, 1]} : vector<2x512xf32> to vector<2x128xf32>
    %84 = arith.negf %83 : vector<2x128xf32>
    %85 = math.exp %84 : vector<2x128xf32>
    %cst_38 = arith.constant 1.000000e+00 : f32
    %86 = vector.broadcast %cst_38 : f32 to vector<2x128xf32>
    %87 = arith.addf %86, %85 : vector<2x128xf32>
    %88 = arith.divf %86, %87 : vector<2x128xf32>
    %89 = vector.extract_strided_slice %79 {offsets = [0, 128], sizes = [2, 128], strides = [1, 1]} : vector<2x512xf32> to vector<2x128xf32>
    %90 = arith.negf %89 : vector<2x128xf32>
    %91 = math.exp %90 : vector<2x128xf32>
    %cst_39 = arith.constant 1.000000e+00 : f32
    %92 = vector.broadcast %cst_39 : f32 to vector<2x128xf32>
    %93 = arith.addf %92, %91 : vector<2x128xf32>
    %94 = arith.divf %92, %93 : vector<2x128xf32>
    %95 = vector.extract_strided_slice %79 {offsets = [0, 256], sizes = [2, 128], strides = [1, 1]} : vector<2x512xf32> to vector<2x128xf32>
    %96 = math.tanh %95 : vector<2x128xf32>
    %97 = vector.extract_strided_slice %79 {offsets = [0, 384], sizes = [2, 128], strides = [1, 1]} : vector<2x512xf32> to vector<2x128xf32>
    %98 = arith.negf %97 : vector<2x128xf32>
    %99 = math.exp %98 : vector<2x128xf32>
    %cst_40 = arith.constant 1.000000e+00 : f32
    %100 = vector.broadcast %cst_40 : f32 to vector<2x128xf32>
    %101 = arith.addf %100, %99 : vector<2x128xf32>
    %102 = arith.divf %100, %101 : vector<2x128xf32>
    %103 = arith.mulf %94, %82 : vector<2x128xf32>
    %104 = arith.mulf %88, %96 : vector<2x128xf32>
    %105 = arith.addf %103, %104 : vector<2x128xf32>
    %106 = math.tanh %105 : vector<2x128xf32>
    %107 = arith.mulf %102, %106 : vector<2x128xf32>
    %108 = tpu.concatenate %107, %105 in 1 : vector<2x128xf32>, vector<2x128xf32> -> vector<2x256xf32>
    %109 = arith.index_cast %c1_i32 : i32 to index
    %c0_41 = arith.constant 0 : index
    %c0_42 = arith.constant 0 : index
    %110 = vector.load %arg7[%109, %c0_41, %c0_42] : memref<2x2x256xf32, #tpu.memory_space<vmem>>, vector<1x2x256xf32>
    %111 = vector.shape_cast %110 : vector<1x2x256xf32> to vector<2x256xf32>
    %112 = vector.shape_cast %108 : vector<2x256xf32> to vector<1x2x256xf32>
    tpu.vector_store %arg7[%109, %c0_41, %c0_42], %112 {strides = array<i32>} : memref<2x2x256xf32, #tpu.memory_space<vmem>>, vector<1x2x256xf32>,
    %113 = arith.truncf %107 : vector<2x128xf32> to vector<2x128xbf16>
    %c0_43 = arith.constant 0 : index
    %c0_44 = arith.constant 0 : index
    %114 = vector.load %arg8[%c0_43, %c0_44] : memref<2x256xbf16, #tpu.memory_space<vmem>>, vector<2x128xbf16>
    tpu.vector_store %arg8[%c0_43, %c0_44], %113 {strides = array<i32>} : memref<2x256xbf16, #tpu.memory_space<vmem>>, vector<2x128xbf16>,
    %c2_i32 = arith.constant 2 : i32
    return
  }
  func.func @transform_0(%arg0: i32) -> (i32, i32) {
    %c0_i32 = arith.constant 0 : i32
    %c0_i32_0 = arith.constant 0 : i32
    %c0_i32_1 = arith.constant 0 : i32
    return %c0_i32, %c0_i32_0 : i32, i32
  }
  func.func @transform_1(%arg0: i32) -> (i32, i32, i32) {
    %c0_i32 = arith.constant 0 : i32
    %c0_i32_0 = arith.constant 0 : i32
    %c0_i32_1 = arith.constant 0 : i32
    %c0_i32_2 = arith.constant 0 : i32
    return %c0_i32, %c0_i32_0, %c0_i32_1 : i32, i32, i32
  }
  func.func @transform_2(%arg0: i32) -> (i32, i32, i32) {
    %c0_i32 = arith.constant 0 : i32
    %c0_i32_0 = arith.constant 0 : i32
    %c0_i32_1 = arith.constant 0 : i32
    %c0_i32_2 = arith.constant 0 : i32
    return %c0_i32, %c0_i32_0, %c0_i32_1 : i32, i32, i32
  }
  func.func @transform_3(%arg0: i32) -> (i32, i32, i32) {
    %c0_i32 = arith.constant 0 : i32
    %c0_i32_0 = arith.constant 0 : i32
    %c0_i32_1 = arith.constant 0 : i32
    %c0_i32_2 = arith.constant 0 : i32
    return %c0_i32, %c0_i32_0, %c0_i32_1 : i32, i32, i32
  }
  func.func @transform_4(%arg0: i32) -> (i32, i32, i32) {
    %c0_i32 = arith.constant 0 : i32
    %c0_i32_0 = arith.constant 0 : i32
    %c0_i32_1 = arith.constant 0 : i32
    %c0_i32_2 = arith.constant 0 : i32
    return %c0_i32, %c0_i32_0, %c0_i32_1 : i32, i32, i32
  }
  func.func @transform_5(%arg0: i32) -> (i32, i32, i32) {
    %c0_i32 = arith.constant 0 : i32
    %c0_i32_0 = arith.constant 0 : i32
    %c0_i32_1 = arith.constant 0 : i32
    %c0_i32_2 = arith.constant 0 : i32
    return %c0_i32, %c0_i32_0, %c0_i32_1 : i32, i32, i32
  }
  func.func @transform_6(%arg0: i32) -> (i32, i32, i32) {
    %c0_i32 = arith.constant 0 : i32
    %c0_i32_0 = arith.constant 0 : i32
    %c0_i32_1 = arith.constant 0 : i32
    %c0_i32_2 = arith.constant 0 : i32
    return %c0_i32, %c0_i32_0, %c0_i32_1 : i32, i32, i32
  }
}

</mosaic_0001>

<llo_original>
// kernel: tpu_custom_call.1
$region0: #{tpu_custom_call.1}
  #allocation0 [shape = 'u32[]', space=smem, size = 0x4, offset = 0x4, fixed_abs, tag = 'smem constant byte address 0x4 - core index']
  #allocation1 [shape = 'u32[144,128]{1,0:T(1,128)}', space=vmem, size = 0x12000, scoped, tag = 'internal scratch']
  #allocation2 [shape = 'bf16[2,256]{1,0:T(2,128)(2,1)}', space=vmem, size = 0x400, scoped, tag = 'scratch operand']
  %s0 = inlined_call_operand.hbm [shape: f32[2,128], index: 0, kind: input, shape index: {}]
  %s1 = inlined_call_operand.hbm [shape: s8[2,256,512], index: 1, kind: input, shape index: {}]
  %s2 = inlined_call_operand.hbm [shape: f32[2,1,512], index: 2, kind: input, shape index: {}]
  %s3 = inlined_call_operand.vmem [shape: f32[2,1,512], index: 3, kind: input, shape index: {}]
  %s4 = inlined_call_operand.vmem [shape: f32[2,2,128], index: 4, kind: input, shape index: {}]
  %s5 = inlined_call_operand.vmem [shape: f32[2,2,128], index: 5, kind: input, shape index: {}]
  %s6 = inlined_call_operand.hbm [shape: f32[2,2,256], index: 6, kind: output, shape index: {}]
  %s7 = sld [smem:[#allocation0]]
  $region46: #{tpu_custom_call.1} parent=0
    _
  %s9 = ssub.s32 1, %s7
  %s10 = scalar_select 0, %s9, %s7
  $region1: #{tpu_custom_call.1} parent=0
    #allocation3 [shape = 'u8[1024]{0}', space=vmem, size = 0x400, scoped, tag = 'input window, operand 0, single buffered']
    #allocation4 [shape = 's32[1]{0}', space=sflag, size = 0x4, scoped, tag = 'scoped memory for tpu_custom_call.1']
    #allocation5 [shape = 's32[1]{0}', space=sflag, size = 0x4, scoped, tag = 'scoped memory for tpu_custom_call.1']
    #allocation6 [shape = 'u8[262144]{0}', space=vmem, size = 0x40000, scoped, tag = 'input window, operand 1, single buffered']
    #allocation7 [shape = 's32[1]{0}', space=sflag, size = 0x4, scoped, tag = 'scoped memory for tpu_custom_call.1']
    #allocation8 [shape = 'u8[4096]{0}', space=vmem, size = 0x1000, scoped, tag = 'input window, operand 2, single buffered']
    #allocation9 [shape = 'u8[4096]{0}', space=vmem, size = 0x1000, scoped, tag = 'output window, operand 0, single buffered']
    %11 = vsyncpa [#allocation4], 0
    %12 = vsyncpa [#allocation7], 0
    %13 = vsyncpa [#allocation5], 0
    // Predicated region
    $region2: #{tpu_custom_call.1} parent=1 // pred_check
      _
    $region3: #{tpu_custom_call.1} parent=1 // pred_check_branch
      %15 = sbr.rel (0) target = $region5
    $region4: #{tpu_custom_call.1} parent=1 // pred_region
      %s17 = ssub.s32 32, 32
      %18 = vsyncadd [#allocation4], %s17
      %s20 = sshll.u32 [#allocation3], 4
      %s21 = int_to_ptr.vmem [resolvable:$true] %s20
      %23 = dma.hbm_to_vmem [thread:$0]  %s0, 32, %s21, [#allocation4]
    $region5: #{tpu_custom_call.1} parent=1 // pred_fallthru
      _
    // Predicated region
    $region6: #{tpu_custom_call.1} parent=1 // pred_check
      _
    $region7: #{tpu_custom_call.1} parent=1 // pred_check_branch
      %25 = sbr.rel (0) target = $region9
    $region8: #{tpu_custom_call.1} parent=1 // pred_region
      %s27 = ssub.s32 8192, 8192
      %28 = vsyncadd [#allocation7], %s27
      %s29 = sshll.u32 [#allocation6], 4
      %s30 = int_to_ptr.vmem [resolvable:$true] %s29
      %35 = dma.hbm_to_vmem [thread:$0]  %s1, 8192, %s30, [#allocation7], 512, 512, 32
    $region9: #{tpu_custom_call.1} parent=1 // pred_fallthru
      _
    // Predicated region
    $region10: #{tpu_custom_call.1} parent=1 // pred_check
      _
    $region11: #{tpu_custom_call.1} parent=1 // pred_check_branch
      %37 = sbr.rel (0) target = $region13
    $region12: #{tpu_custom_call.1} parent=1 // pred_region
      %s39 = ssub.s32 128, 128
      %40 = vsyncadd [#allocation7], %s39
      %s41 = sshll.u32 [#allocation8], 4
      %s42 = int_to_ptr.vmem [resolvable:$true] %s41
      %47 = dma.hbm_to_vmem [thread:$0]  %s2, 128, %s42, [#allocation7], 64, 64, 4
    $region13: #{tpu_custom_call.1} parent=1 // pred_fallthru
      _
    // Predicated region
    $region14: #{tpu_custom_call.1} parent=1 // pred_check
      _
    $region15: #{tpu_custom_call.1} parent=1 // pred_check_branch
      %49 = sbr.rel (0) target = $region17
    $region16: #{tpu_custom_call.1} parent=1 // pred_region
      _
    $region17: #{tpu_custom_call.1} parent=1 // pred_fallthru
      _
    // Predicated region
    $region18: #{tpu_custom_call.1} parent=1 // pred_check
      _
    $region19: #{tpu_custom_call.1} parent=1 // pred_check_branch
      %51 = sbr.rel (0) target = $region21
    $region20: #{tpu_custom_call.1} parent=1 // pred_region
      _
    $region21: #{tpu_custom_call.1} parent=1 // pred_fallthru
      _
    // Predicated region
    $region22: #{tpu_custom_call.1} parent=1 // pred_check
      _
    $region23: #{tpu_custom_call.1} parent=1 // pred_check_branch
      %53 = sbr.rel (0) target = $region25
    $region24: #{tpu_custom_call.1} parent=1 // pred_region
      _
    $region25: #{tpu_custom_call.1} parent=1 // pred_fallthru
      _
    // Predicated region
    $region26: #{tpu_custom_call.1} parent=1 // pred_check
      _
    $region27: #{tpu_custom_call.1} parent=1 // pred_check_branch
      %55 = sbr.rel (0) target = $region29
    $region28: #{tpu_custom_call.1} parent=1 // pred_region
      %56 = dma.done [#allocation4], 32
    $region29: #{tpu_custom_call.1} parent=1 // pred_fallthru
      _
    // Predicated region
    $region30: #{tpu_custom_call.1} parent=1 // pred_check
      _
    $region31: #{tpu_custom_call.1} parent=1 // pred_check_branch
      %58 = sbr.rel (0) target = $region33
    $region32: #{tpu_custom_call.1} parent=1 // pred_region
      %59 = dma.done [#allocation7], 8192
    $region33: #{tpu_custom_call.1} parent=1 // pred_fallthru
      _
    // Predicated region
    $region34: #{tpu_custom_call.1} parent=1 // pred_check
      _
    $region35: #{tpu_custom_call.1} parent=1 // pred_check_branch
      %61 = sbr.rel (0) target = $region37
    $region36: #{tpu_custom_call.1} parent=1 // pred_region
      %62 = dma.done [#allocation7], 128
    $region37: #{tpu_custom_call.1} parent=1 // pred_fallthru
      _
    %v63 = vld [vmem:[#allocation3] sm:$0x3]
    %v64 = vpack.c.bf16 %v63, %v63
    %65 = vst [vmem:[#allocation2] sm:$0x1] %v64
    %v66 = vld [vmem:[%s4] sm:$0x3]
    %v67 = vpack.c.bf16 %v66, %v66
    %68 = vst [vmem:[#allocation2 + $0x1] sm:$0x1] %v67
    %v69 = vld [vmem:[#allocation6] sm:$0xff]
    %v70 = vld [vmem:[#allocation6 + $0x8] sm:$0xff]
    %v71 = vld [vmem:[#allocation6 + $0x10] sm:$0xff]
    %v72 = vld [vmem:[#allocation6 + $0x18] sm:$0xff]
    %v73 = vld [vmem:[#allocation6 + $0x20] sm:$0xff]
    %v74 = vld [vmem:[#allocation6 + $0x28] sm:$0xff]
    %v75 = vld [vmem:[#allocation6 + $0x30] sm:$0xff]
    %v76 = vld [vmem:[#allocation6 + $0x38] sm:$0xff]
    %v77 = vld [vmem:[#allocation6 + $0x40] sm:$0xff]
    %v78 = vld [vmem:[#allocation6 + $0x48] sm:$0xff]
    %v79 = vld [vmem:[#allocation6 + $0x50] sm:$0xff]
    %v80 = vld [vmem:[#allocation6 + $0x58] sm:$0xff]
    %v81 = vld [vmem:[#allocation6 + $0x60] sm:$0xff]
    %v82 = vld [vmem:[#allocation6 + $0x68] sm:$0xff]
    %v83 = vld [vmem:[#allocation6 + $0x70] sm:$0xff]
    %v84 = vld [vmem:[#allocation6 + $0x78] sm:$0xff]
    %v85 = vld [vmem:[#allocation6 + $0x80] sm:$0xff]
    %v86 = vld [vmem:[#allocation6 + $0x88] sm:$0xff]
    %v87 = vld [vmem:[#allocation6 + $0x90] sm:$0xff]
    %v88 = vld [vmem:[#allocation6 + $0x98] sm:$0xff]
    %v89 = vld [vmem:[#allocation6 + $0xa0] sm:$0xff]
    %v90 = vld [vmem:[#allocation6 + $0xa8] sm:$0xff]
    %v91 = vld [vmem:[#allocation6 + $0xb0] sm:$0xff]
    %v92 = vld [vmem:[#allocation6 + $0xb8] sm:$0xff]
    %v93 = vld [vmem:[#allocation6 + $0xc0] sm:$0xff]
    %v94 = vld [vmem:[#allocation6 + $0xc8] sm:$0xff]
    %v95 = vld [vmem:[#allocation6 + $0xd0] sm:$0xff]
    %v96 = vld [vmem:[#allocation6 + $0xd8] sm:$0xff]
    %v97 = vld [vmem:[#allocation6 + $0xe0] sm:$0xff]
    %v98 = vld [vmem:[#allocation6 + $0xe8] sm:$0xff]
    %v99 = vld [vmem:[#allocation6 + $0xf0] sm:$0xff]
    %v100 = vld [vmem:[#allocation6 + $0xf8] sm:$0xff]
    %v101 = vunpack.c.l.s8.bf16 %v69
    %v102 = vunpack.c.l.s8.bf16 %v70
    %v103 = vunpack.c.l.s8.bf16 %v71
    %v104 = vunpack.c.l.s8.bf16 %v72
    %v105 = vunpack.c.h.s8.bf16 %v69
    %v106 = vunpack.c.h.s8.bf16 %v70
    %v107 = vunpack.c.h.s8.bf16 %v71
    %v108 = vunpack.c.h.s8.bf16 %v72
    %v109 = vunpack.c.l.s8.bf16 %v73
    %v110 = vunpack.c.l.s8.bf16 %v74
    %v111 = vunpack.c.l.s8.bf16 %v75
    %v112 = vunpack.c.l.s8.bf16 %v76
    %v113 = vunpack.c.h.s8.bf16 %v73
    %v114 = vunpack.c.h.s8.bf16 %v74
    %v115 = vunpack.c.h.s8.bf16 %v75
    %v116 = vunpack.c.h.s8.bf16 %v76
    %v117 = vunpack.c.l.s8.bf16 %v77
    %v118 = vunpack.c.l.s8.bf16 %v78
    %v119 = vunpack.c.l.s8.bf16 %v79
    %v120 = vunpack.c.l.s8.bf16 %v80
    %v121 = vunpack.c.h.s8.bf16 %v77
    %v122 = vunpack.c.h.s8.bf16 %v78
    %v123 = vunpack.c.h.s8.bf16 %v79
    %v124 = vunpack.c.h.s8.bf16 %v80
    %v125 = vunpack.c.l.s8.bf16 %v81
    %v126 = vunpack.c.l.s8.bf16 %v82
    %v127 = vunpack.c.l.s8.bf16 %v83
    %v128 = vunpack.c.l.s8.bf16 %v84
    %v129 = vunpack.c.h.s8.bf16 %v81
    %v130 = vunpack.c.h.s8.bf16 %v82
    %v131 = vunpack.c.h.s8.bf16 %v83
    %v132 = vunpack.c.h.s8.bf16 %v84
    %v133 = vunpack.c.l.s8.bf16 %v85
    %v134 = vunpack.c.l.s8.bf16 %v86
    %v135 = vunpack.c.l.s8.bf16 %v87
    %v136 = vunpack.c.l.s8.bf16 %v88
    %v137 = vunpack.c.h.s8.bf16 %v85
    %v138 = vunpack.c.h.s8.bf16 %v86
    %v139 = vunpack.c.h.s8.bf16 %v87
    %v140 = vunpack.c.h.s8.bf16 %v88
    %v141 = vunpack.c.l.s8.bf16 %v89
    %v142 = vunpack.c.l.s8.bf16 %v90
    %v143 = vunpack.c.l.s8.bf16 %v91
    %v144 = vunpack.c.l.s8.bf16 %v92
    %v145 = vunpack.c.h.s8.bf16 %v89
    %v146 = vunpack.c.h.s8.bf16 %v90
    %v147 = vunpack.c.h.s8.bf16 %v91
    %v148 = vunpack.c.h.s8.bf16 %v92
    %v149 = vunpack.c.l.s8.bf16 %v93
    %v150 = vunpack.c.l.s8.bf16 %v94
    %v151 = vunpack.c.l.s8.bf16 %v95
    %v152 = vunpack.c.l.s8.bf16 %v96
    %v153 = vunpack.c.h.s8.bf16 %v93
    %v154 = vunpack.c.h.s8.bf16 %v94
    %v155 = vunpack.c.h.s8.bf16 %v95
    %v156 = vunpack.c.h.s8.bf16 %v96
    %v157 = vunpack.c.l.s8.bf16 %v97
    %v158 = vunpack.c.l.s8.bf16 %v98
    %v159 = vunpack.c.l.s8.bf16 %v99
    %v160 = vunpack.c.l.s8.bf16 %v100
    %v161 = vunpack.c.h.s8.bf16 %v97
    %v162 = vunpack.c.h.s8.bf16 %v98
    %v163 = vunpack.c.h.s8.bf16 %v99
    %v164 = vunpack.c.h.s8.bf16 %v100
    %v165 = vld [vmem:[#allocation2] sm:$0x3]
    %v168 = vunpack.c.l.s4 1966171168
    %v169 = vunpack.c.0.s8 %v168
    %v170 = vlaneseq
    %v171 = vshrl.u32 %v170, 7
    %v172 = vsub.s32 %v169, %v171
    %v173 = vrot.slane %v165, %v172
    %v174 = vcombine.high %v173, %v173
    %v176 = vunpack.c.l.s4 1966171168
    %v177 = vunpack.c.0.s8 %v176
    %v178 = vlaneseq
    %v179 = vshrl.u32 %v178, 7
    %v180 = vsub.s32 %v177, %v179
    %v181 = vrot.slane %v173, %v180
    %v183 = vunpack.c.l.s4 1966171168
    %v184 = vunpack.c.0.s8 %v183
    %v185 = vlaneseq
    %v186 = vshrl.u32 %v185, 7
    %v187 = vsub.s32 %v184, %v186
    %v188 = vrot.slane %v174, %v187
    %191 = vmatprep.subr.bf16.mxu0 %v102
    %192 = vmatpush1.bf16.msra.mxu0 %v101
    %193 = vmatprep.subr.bf16.mxu0 %v106
    %194 = vmatpush1.bf16.msra.mxu0 %v105
    %195 = vmatprep.subr.bf16.mxu0 %v110
    %196 = vmatpush1.bf16.msra.mxu0 %v109
    %197 = vmatprep.subr.bf16.mxu0 %v114
    %198 = vmatpush1.bf16.msra.mxu0 %v113
    %199 = vmatprep.subr.bf16.mxu0 %v118
    %200 = vmatpush1.bf16.msra.mxu0 %v117
    %201 = vmatprep.subr.bf16.mxu0 %v122
    %202 = vmatpush1.bf16.msra.mxu0 %v121
    %203 = vmatprep.subr.bf16.mxu0 %v126
    %204 = vmatpush1.bf16.msra.mxu0 %v125
    %205 = vmatprep.subr.bf16.mxu0 %v130
    %206 = vmatpush1.bf16.msra.mxu0 %v129
    %207 = vmatprep.subr.bf16.mxu0 %v134
    %208 = vmatpush1.bf16.msra.mxu0 %v133
    %209 = vmatprep.subr.bf16.mxu0 %v138
    %210 = vmatpush1.bf16.msra.mxu0 %v137
    %211 = vmatprep.subr.bf16.mxu0 %v142
    %212 = vmatpush1.bf16.msra.mxu0 %v141
    %213 = vmatprep.subr.bf16.mxu0 %v146
    %214 = vmatpush1.bf16.msra.mxu0 %v145
    %215 = vmatprep.subr.bf16.mxu0 %v150
    %216 = vmatpush1.bf16.msra.mxu0 %v149
    %217 = vmatprep.subr.bf16.mxu0 %v154
    %218 = vmatpush1.bf16.msra.mxu0 %v153
    %219 = vmatprep.subr.bf16.mxu0 %v158
    %220 = vmatpush1.bf16.msra.mxu0 %v157
    %221 = vmatprep.subr.bf16.mxu0 %v162
    %222 = vmatpush1.bf16.msra.mxu0 %v161
    %223 = vmatprep.mubr.bf16.mxu0 %v188
    %224 = vmatmul.mubr.bf16.gmra.mrb[0].mxu0 %v181
    %v225 = vpop.f32.mrb[0].mxu0
    %v226 = vadd.f32 0.0, %v225
    %v227 = vpop.f32.mrb[0].mxu0
    %v228 = vadd.f32 0.0, %v227
    %v229 = vpop.f32.mrb[0].mxu0
    %v230 = vpop.f32.mrb[0].mxu0
    %231 = vdwg.mxu0
    %232 = vmatprep.subr.bf16.mxu0 %v104
    %233 = vmatpush1.bf16.msra.mxu0 %v103
    %234 = vmatprep.subr.bf16.mxu0 %v108
    %235 = vmatpush1.bf16.msra.mxu0 %v107
    %236 = vmatprep.subr.bf16.mxu0 %v112
    %237 = vmatpush1.bf16.msra.mxu0 %v111
    %238 = vmatprep.subr.bf16.mxu0 %v116
    %239 = vmatpush1.bf16.msra.mxu0 %v115
    %240 = vmatprep.subr.bf16.mxu0 %v120
    %241 = vmatpush1.bf16.msra.mxu0 %v119
    %242 = vmatprep.subr.bf16.mxu0 %v124
    %243 = vmatpush1.bf16.msra.mxu0 %v123
    %244 = vmatprep.subr.bf16.mxu0 %v128
    %245 = vmatpush1.bf16.msra.mxu0 %v127
    %246 = vmatprep.subr.bf16.mxu0 %v132
    %247 = vmatpush1.bf16.msra.mxu0 %v131
    %248 = vmatprep.subr.bf16.mxu0 %v136
    %249 = vmatpush1.bf16.msra.mxu0 %v135
    %250 = vmatprep.subr.bf16.mxu0 %v140
    %251 = vmatpush1.bf16.msra.mxu0 %v139
    %252 = vmatprep.subr.bf16.mxu0 %v144
    %253 = vmatpush1.bf16.msra.mxu0 %v143
    %254 = vmatprep.subr.bf16.mxu0 %v148
    %255 = vmatpush1.bf16.msra.mxu0 %v147
    %256 = vmatprep.subr.bf16.mxu0 %v152
    %257 = vmatpush1.bf16.msra.mxu0 %v151
    %258 = vmatprep.subr.bf16.mxu0 %v156
    %259 = vmatpush1.bf16.msra.mxu0 %v155
    %260 = vmatprep.subr.bf16.mxu0 %v160
    %261 = vmatpush1.bf16.msra.mxu0 %v159
    %262 = vmatprep.subr.bf16.mxu0 %v164
    %263 = vmatpush1.bf16.msra.mxu0 %v163
    %264 = vmatprep.mubr.bf16.mxu0 %v188
    %265 = vmatmul.mubr.bf16.gmra.mrb[0].mxu0 %v181
    %v266 = vpop.f32.mrb[0].mxu0
    %v267 = vadd.f32 0.0, %v266
    %v268 = vpop.f32.mrb[0].mxu0
    %v269 = vadd.f32 0.0, %v268
    %v270 = vpop.f32.mrb[0].mxu0
    %v271 = vpop.f32.mrb[0].mxu0
    %272 = vdwg.mxu0
    %v273 = vld [vmem:[#allocation8] sm:$0xf]
    %v275 = vlaneseq
    %v276 = vshrl.u32 %v275, 7
    %v277 = vsub.s32 0, %v276
    %v278 = vrot.slane %v273, %v277
    %v279 = vlaneseq
    %v280 = vshrl.u32 %v279, 7
    %v281 = vsub.s32 1, %v280
    %v282 = vrot.slane %v273, %v281
    %v283 = vlaneseq
    %v284 = vshrl.u32 %v283, 7
    %v285 = vsub.s32 2, %v284
    %v286 = vrot.slane %v273, %v285
    %v287 = vlaneseq
    %v288 = vshrl.u32 %v287, 7
    %v289 = vsub.s32 3, %v288
    %v290 = vrot.slane %v273, %v289
    %v295 = vmul.f32 %v226, %v278
    %v296 = vmul.f32 %v228, %v282
    %v297 = vmul.f32 %v267, %v286
    %v298 = vmul.f32 %v269, %v290
    %v299 = vld [vmem:[%s3] sm:$0xf]
    %v301 = vlaneseq
    %v302 = vshrl.u32 %v301, 7
    %v303 = vsub.s32 0, %v302
    %v304 = vrot.slane %v299, %v303
    %v305 = vlaneseq
    %v306 = vshrl.u32 %v305, 7
    %v307 = vsub.s32 1, %v306
    %v308 = vrot.slane %v299, %v307
    %v309 = vlaneseq
    %v310 = vshrl.u32 %v309, 7
    %v311 = vsub.s32 2, %v310
    %v312 = vrot.slane %v299, %v311
    %v313 = vlaneseq
    %v314 = vshrl.u32 %v313, 7
    %v315 = vsub.s32 3, %v314
    %v316 = vrot.slane %v299, %v315
    %v321 = vadd.f32 %v295, %v304
    %v322 = vadd.f32 %v296, %v308
    %v323 = vadd.f32 %v297, %v312
    %v324 = vadd.f32 %v298, %v316
    %v325 = vld [vmem:[%s5] sm:$0x3]
    %v326 = vxor.u32 %v321, 2147483648
    %v327 = vmul.f32 %v326, 1.442695
    %v328 = vpow.pop %v327
    %v329 = vadd.f32 %v328, 1.0
    %v330 = vrcp.pop %v329
    %v331 = vmul.f32 1.0, %v330
    %v332 = vxor.u32 %v322, 2147483648
    %v333 = vmul.f32 %v332, 1.442695
    %v334 = vpow.pop %v333
    %v335 = vadd.f32 %v334, 1.0
    %v336 = vrcp.pop %v335
    %v337 = vmul.f32 1.0, %v336
    %v338 = vtanh.pop %v323
    %v339 = vxor.u32 %v324, 2147483648
    %v340 = vmul.f32 %v339, 1.442695
    %v341 = vpow.pop %v340
    %v342 = vadd.f32 %v341, 1.0
    %v343 = vrcp.pop %v342
    %v344 = vmul.f32 1.0, %v343
    %v345 = vmul.f32 %v337, %v325
    %v346 = vmul.f32 %v331, %v338
    %v347 = vadd.f32 %v345, %v346
    %v348 = vtanh.pop %v347
    %v349 = vmul.f32 %v344, %v348
    %v352 = vcombine.low %v349, %v347
    %v354 = vunpack.c.l.s4 1983009808
    %v355 = vunpack.c.0.s8 %v354
    %v356 = vlaneseq
    %v357 = vshrl.u32 %v356, 7
    %v358 = vsub.s32 %v355, %v357
    %v359 = vrot.slane %v352, %v358
    %361 = vst [vmem:[#allocation9] sm:$0xf] %v359
    %v362 = vpack.c.bf16 %v349, %v349
    %363 = vst [vmem:[#allocation2] sm:$0x1] %v362
    %s364 = scalar_lea.vmem %s4, 2
    %v365 = vld [vmem:[%s364] sm:$0x3]
    %v366 = vpack.c.bf16 %v365, %v365
    %367 = vst [vmem:[#allocation2 + $0x1] sm:$0x1] %v366
    %s368 = scalar_lea.vmem [#allocation6], 256
    %v369 = vld [vmem:[%s368] sm:$0xff]
    %v370 = vld [vmem:[%s368 + $0x8] sm:$0xff]
    %v371 = vld [vmem:[%s368 + $0x10] sm:$0xff]
    %v372 = vld [vmem:[%s368 + $0x18] sm:$0xff]
    %v373 = vld [vmem:[%s368 + $0x20] sm:$0xff]
    %v374 = vld [vmem:[%s368 + $0x28] sm:$0xff]
    %v375 = vld [vmem:[%s368 + $0x30] sm:$0xff]
    %v376 = vld [vmem:[%s368 + $0x38] sm:$0xff]
    %v377 = vld [vmem:[%s368 + $0x40] sm:$0xff]
    %v378 = vld [vmem:[%s368 + $0x48] sm:$0xff]
    %v379 = vld [vmem:[%s368 + $0x50] sm:$0xff]
    %v380 = vld [vmem:[%s368 + $0x58] sm:$0xff]
    %v381 = vld [vmem:[%s368 + $0x60] sm:$0xff]
    %v382 = vld [vmem:[%s368 + $0x68] sm:$0xff]
    %v383 = vld [vmem:[%s368 + $0x70] sm:$0xff]
    %v384 = vld [vmem:[%s368 + $0x78] sm:$0xff]
    %v385 = vld [vmem:[%s368 + $0x80] sm:$0xff]
    %v386 = vld [vmem:[%s368 + $0x88] sm:$0xff]
    %v387 = vld [vmem:[%s368 + $0x90] sm:$0xff]
    %v388 = vld [vmem:[%s368 + $0x98] sm:$0xff]
    %v389 = vld [vmem:[%s368 + $0xa0] sm:$0xff]
    %v390 = vld [vmem:[%s368 + $0xa8] sm:$0xff]
    %v391 = vld [vmem:[%s368 + $0xb0] sm:$0xff]
    %v392 = vld [vmem:[%s368 + $0xb8] sm:$0xff]
    %v393 = vld [vmem:[%s368 + $0xc0] sm:$0xff]
    %v394 = vld [vmem:[%s368 + $0xc8] sm:$0xff]
    %v395 = vld [vmem:[%s368 + $0xd0] sm:$0xff]
    %v396 = vld [vmem:[%s368 + $0xd8] sm:$0xff]
    %v397 = vld [vmem:[%s368 + $0xe0] sm:$0xff]
    %v398 = vld [vmem:[%s368 + $0xe8] sm:$0xff]
    %v399 = vld [vmem:[%s368 + $0xf0] sm:$0xff]
    %v400 = vld [vmem:[%s368 + $0xf8] sm:$0xff]
    %v401 = vunpack.c.l.s8.bf16 %v369
    %v402 = vunpack.c.l.s8.bf16 %v370
    %v403 = vunpack.c.l.s8.bf16 %v371
    %v404 = vunpack.c.l.s8.bf16 %v372
    %v405 = vunpack.c.h.s8.bf16 %v369
    %v406 = vunpack.c.h.s8.bf16 %v370
    %v407 = vunpack.c.h.s8.bf16 %v371
    %v408 = vunpack.c.h.s8.bf16 %v372
    %v409 = vunpack.c.l.s8.bf16 %v373
    %v410 = vunpack.c.l.s8.bf16 %v374
    %v411 = vunpack.c.l.s8.bf16 %v375
    %v412 = vunpack.c.l.s8.bf16 %v376
    %v413 = vunpack.c.h.s8.bf16 %v373
    %v414 = vunpack.c.h.s8.bf16 %v374
    %v415 = vunpack.c.h.s8.bf16 %v375
    %v416 = vunpack.c.h.s8.bf16 %v376
    %v417 = vunpack.c.l.s8.bf16 %v377
    %v418 = vunpack.c.l.s8.bf16 %v378
    %v419 = vunpack.c.l.s8.bf16 %v379
    %v420 = vunpack.c.l.s8.bf16 %v380
    %v421 = vunpack.c.h.s8.bf16 %v377
    %v422 = vunpack.c.h.s8.bf16 %v378
    %v423 = vunpack.c.h.s8.bf16 %v379
    %v424 = vunpack.c.h.s8.bf16 %v380
    %v425 = vunpack.c.l.s8.bf16 %v381
    %v426 = vunpack.c.l.s8.bf16 %v382
    %v427 = vunpack.c.l.s8.bf16 %v383
    %v428 = vunpack.c.l.s8.bf16 %v384
    %v429 = vunpack.c.h.s8.bf16 %v381
    %v430 = vunpack.c.h.s8.bf16 %v382
    %v431 = vunpack.c.h.s8.bf16 %v383
    %v432 = vunpack.c.h.s8.bf16 %v384
    %v433 = vunpack.c.l.s8.bf16 %v385
    %v434 = vunpack.c.l.s8.bf16 %v386
    %v435 = vunpack.c.l.s8.bf16 %v387
    %v436 = vunpack.c.l.s8.bf16 %v388
    %v437 = vunpack.c.h.s8.bf16 %v385
    %v438 = vunpack.c.h.s8.bf16 %v386
    %v439 = vunpack.c.h.s8.bf16 %v387
    %v440 = vunpack.c.h.s8.bf16 %v388
    %v441 = vunpack.c.l.s8.bf16 %v389
    %v442 = vunpack.c.l.s8.bf16 %v390
    %v443 = vunpack.c.l.s8.bf16 %v391
    %v444 = vunpack.c.l.s8.bf16 %v392
    %v445 = vunpack.c.h.s8.bf16 %v389
    %v446 = vunpack.c.h.s8.bf16 %v390
    %v447 = vunpack.c.h.s8.bf16 %v391
    %v448 = vunpack.c.h.s8.bf16 %v392
    %v449 = vunpack.c.l.s8.bf16 %v393
    %v450 = vunpack.c.l.s8.bf16 %v394
    %v451 = vunpack.c.l.s8.bf16 %v395
    %v452 = vunpack.c.l.s8.bf16 %v396
    %v453 = vunpack.c.h.s8.bf16 %v393
    %v454 = vunpack.c.h.s8.bf16 %v394
    %v455 = vunpack.c.h.s8.bf16 %v395
    %v456 = vunpack.c.h.s8.bf16 %v396
    %v457 = vunpack.c.l.s8.bf16 %v397
    %v458 = vunpack.c.l.s8.bf16 %v398
    %v459 = vunpack.c.l.s8.bf16 %v399
    %v460 = vunpack.c.l.s8.bf16 %v400
    %v461 = vunpack.c.h.s8.bf16 %v397
    %v462 = vunpack.c.h.s8.bf16 %v398
    %v463 = vunpack.c.h.s8.bf16 %v399
    %v464 = vunpack.c.h.s8.bf16 %v400
    %v465 = vld [vmem:[#allocation2] sm:$0x3]
    %v468 = vunpack.c.l.s4 1966171168
    %v469 = vunpack.c.0.s8 %v468
    %v470 = vlaneseq
    %v471 = vshrl.u32 %v470, 7
    %v472 = vsub.s32 %v469, %v471
    %v473 = vrot.slane %v465, %v472
    %v474 = vcombine.high %v473, %v473
    %v476 = vunpack.c.l.s4 1966171168
    %v477 = vunpack.c.0.s8 %v476
    %v478 = vlaneseq
    %v479 = vshrl.u32 %v478, 7
    %v480 = vsub.s32 %v477, %v479
    %v481 = vrot.slane %v473, %v480
    %v483 = vunpack.c.l.s4 1966171168
    %v484 = vunpack.c.0.s8 %v483
    %v485 = vlaneseq
    %v486 = vshrl.u32 %v485, 7
    %v487 = vsub.s32 %v484, %v486
    %v488 = vrot.slane %v474, %v487
    %491 = vmatprep.subr.bf16.mxu0 %v402
    %492 = vmatpush1.bf16.msra.mxu0 %v401
    %493 = vmatprep.subr.bf16.mxu0 %v406
    %494 = vmatpush1.bf16.msra.mxu0 %v405
    %495 = vmatprep.subr.bf16.mxu0 %v410
    %496 = vmatpush1.bf16.msra.mxu0 %v409
    %497 = vmatprep.subr.bf16.mxu0 %v414
    %498 = vmatpush1.bf16.msra.mxu0 %v413
    %499 = vmatprep.subr.bf16.mxu0 %v418
    %500 = vmatpush1.bf16.msra.mxu0 %v417
    %501 = vmatprep.subr.bf16.mxu0 %v422
    %502 = vmatpush1.bf16.msra.mxu0 %v421
    %503 = vmatprep.subr.bf16.mxu0 %v426
    %504 = vmatpush1.bf16.msra.mxu0 %v425
    %505 = vmatprep.subr.bf16.mxu0 %v430
    %506 = vmatpush1.bf16.msra.mxu0 %v429
    %507 = vmatprep.subr.bf16.mxu0 %v434
    %508 = vmatpush1.bf16.msra.mxu0 %v433
    %509 = vmatprep.subr.bf16.mxu0 %v438
    %510 = vmatpush1.bf16.msra.mxu0 %v437
    %511 = vmatprep.subr.bf16.mxu0 %v442
    %512 = vmatpush1.bf16.msra.mxu0 %v441
    %513 = vmatprep.subr.bf16.mxu0 %v446
    %514 = vmatpush1.bf16.msra.mxu0 %v445
    %515 = vmatprep.subr.bf16.mxu0 %v450
    %516 = vmatpush1.bf16.msra.mxu0 %v449
    %517 = vmatprep.subr.bf16.mxu0 %v454
    %518 = vmatpush1.bf16.msra.mxu0 %v453
    %519 = vmatprep.subr.bf16.mxu0 %v458
    %520 = vmatpush1.bf16.msra.mxu0 %v457
    %521 = vmatprep.subr.bf16.mxu0 %v462
    %522 = vmatpush1.bf16.msra.mxu0 %v461
    %523 = vmatprep.mubr.bf16.mxu0 %v488
    %524 = vmatmul.mubr.bf16.gmra.mrb[0].mxu0 %v481
    %v525 = vpop.f32.mrb[0].mxu0
    %v526 = vadd.f32 0.0, %v525
    %v527 = vpop.f32.mrb[0].mxu0
    %v528 = vadd.f32 0.0, %v527
    %v529 = vpop.f32.mrb[0].mxu0
    %v530 = vpop.f32.mrb[0].mxu0
    %531 = vdwg.mxu0
    %532 = vmatprep.subr.bf16.mxu0 %v404
    %533 = vmatpush1.bf16.msra.mxu0 %v403
    %534 = vmatprep.subr.bf16.mxu0 %v408
    %535 = vmatpush1.bf16.msra.mxu0 %v407
    %536 = vmatprep.subr.bf16.mxu0 %v412
    %537 = vmatpush1.bf16.msra.mxu0 %v411
    %538 = vmatprep.subr.bf16.mxu0 %v416
    %539 = vmatpush1.bf16.msra.mxu0 %v415
    %540 = vmatprep.subr.bf16.mxu0 %v420
    %541 = vmatpush1.bf16.msra.mxu0 %v419
    %542 = vmatprep.subr.bf16.mxu0 %v424
    %543 = vmatpush1.bf16.msra.mxu0 %v423
    %544 = vmatprep.subr.bf16.mxu0 %v428
    %545 = vmatpush1.bf16.msra.mxu0 %v427
    %546 = vmatprep.subr.bf16.mxu0 %v432
    %547 = vmatpush1.bf16.msra.mxu0 %v431
    %548 = vmatprep.subr.bf16.mxu0 %v436
    %549 = vmatpush1.bf16.msra.mxu0 %v435
    %550 = vmatprep.subr.bf16.mxu0 %v440
    %551 = vmatpush1.bf16.msra.mxu0 %v439
    %552 = vmatprep.subr.bf16.mxu0 %v444
    %553 = vmatpush1.bf16.msra.mxu0 %v443
    %554 = vmatprep.subr.bf16.mxu0 %v448
    %555 = vmatpush1.bf16.msra.mxu0 %v447
    %556 = vmatprep.subr.bf16.mxu0 %v452
    %557 = vmatpush1.bf16.msra.mxu0 %v451
    %558 = vmatprep.subr.bf16.mxu0 %v456
    %559 = vmatpush1.bf16.msra.mxu0 %v455
    %560 = vmatprep.subr.bf16.mxu0 %v460
    %561 = vmatpush1.bf16.msra.mxu0 %v459
    %562 = vmatprep.subr.bf16.mxu0 %v464
    %563 = vmatpush1.bf16.msra.mxu0 %v463
    %564 = vmatprep.mubr.bf16.mxu0 %v488
    %565 = vmatmul.mubr.bf16.gmra.mrb[0].mxu0 %v481
    %v566 = vpop.f32.mrb[0].mxu0
    %v567 = vadd.f32 0.0, %v566
    %v568 = vpop.f32.mrb[0].mxu0
    %v569 = vadd.f32 0.0, %v568
    %v570 = vpop.f32.mrb[0].mxu0
    %v571 = vpop.f32.mrb[0].mxu0
    %572 = vdwg.mxu0
    %s573 = scalar_lea.vmem [#allocation8], 4
    %v574 = vld [vmem:[%s573] sm:$0xf]
    %v576 = vlaneseq
    %v577 = vshrl.u32 %v576, 7
    %v578 = vsub.s32 0, %v577
    %v579 = vrot.slane %v574, %v578
    %v580 = vlaneseq
    %v581 = vshrl.u32 %v580, 7
    %v582 = vsub.s32 1, %v581
    %v583 = vrot.slane %v574, %v582
    %v584 = vlaneseq
    %v585 = vshrl.u32 %v584, 7
    %v586 = vsub.s32 2, %v585
    %v587 = vrot.slane %v574, %v586
    %v588 = vlaneseq
    %v589 = vshrl.u32 %v588, 7
    %v590 = vsub.s32 3, %v589
    %v591 = vrot.slane %v574, %v590
    %v596 = vmul.f32 %v526, %v579
    %v597 = vmul.f32 %v528, %v583
    %v598 = vmul.f32 %v567, %v587
    %v599 = vmul.f32 %v569, %v591
    %s600 = scalar_lea.vmem %s3, 4
    %v601 = vld [vmem:[%s600] sm:$0xf]
    %v603 = vlaneseq
    %v604 = vshrl.u32 %v603, 7
    %v605 = vsub.s32 0, %v604
    %v606 = vrot.slane %v601, %v605
    %v607 = vlaneseq
    %v608 = vshrl.u32 %v607, 7
    %v609 = vsub.s32 1, %v608
    %v610 = vrot.slane %v601, %v609
    %v611 = vlaneseq
    %v612 = vshrl.u32 %v611, 7
    %v613 = vsub.s32 2, %v612
    %v614 = vrot.slane %v601, %v613
    %v615 = vlaneseq
    %v616 = vshrl.u32 %v615, 7
    %v617 = vsub.s32 3, %v616
    %v618 = vrot.slane %v601, %v617
    %v623 = vadd.f32 %v596, %v606
    %v624 = vadd.f32 %v597, %v610
    %v625 = vadd.f32 %v598, %v614
    %v626 = vadd.f32 %v599, %v618
    %s627 = scalar_lea.vmem %s5, 2
    %v628 = vld [vmem:[%s627] sm:$0x3]
    %v629 = vxor.u32 %v623, 2147483648
    %v630 = vmul.f32 %v629, 1.442695
    %v631 = vpow.pop %v630
    %v632 = vadd.f32 %v631, 1.0
    %v633 = vrcp.pop %v632
    %v634 = vmul.f32 1.0, %v633
    %v635 = vxor.u32 %v624, 2147483648
    %v636 = vmul.f32 %v635, 1.442695
    %v637 = vpow.pop %v636
    %v638 = vadd.f32 %v637, 1.0
    %v639 = vrcp.pop %v638
    %v640 = vmul.f32 1.0, %v639
    %v641 = vtanh.pop %v625
    %v642 = vxor.u32 %v626, 2147483648
    %v643 = vmul.f32 %v642, 1.442695
    %v644 = vpow.pop %v643
    %v645 = vadd.f32 %v644, 1.0
    %v646 = vrcp.pop %v645
    %v647 = vmul.f32 1.0, %v646
    %v648 = vmul.f32 %v640, %v628
    %v649 = vmul.f32 %v634, %v641
    %v650 = vadd.f32 %v648, %v649
    %v651 = vtanh.pop %v650
    %v652 = vmul.f32 %v647, %v651
    %v655 = vcombine.low %v652, %v650
    %v657 = vunpack.c.l.s4 1983009808
    %v658 = vunpack.c.0.s8 %v657
    %v659 = vlaneseq
    %v660 = vshrl.u32 %v659, 7
    %v661 = vsub.s32 %v658, %v660
    %v662 = vrot.slane %v655, %v661
    %s664 = scalar_lea.vmem [#allocation9], 4
    %665 = vst [vmem:[%s664] sm:$0xf] %v662
    %v666 = vpack.c.bf16 %v652, %v652
    %667 = vst [vmem:[#allocation2] sm:$0x1] %v666
    // Predicated region
    $region38: #{tpu_custom_call.1} parent=1 // pred_check
      _
    $region39: #{tpu_custom_call.1} parent=1 // pred_check_branch
      %669 = sbr.rel (0) target = $region41
    $region40: #{tpu_custom_call.1} parent=1 // pred_region
      %s671 = ssub.s32 128, 128
      %672 = vsyncadd [#allocation5], %s671
      %s673 = sshll.u32 [#allocation9], 4
      %s674 = int_to_ptr.vmem [resolvable:$true] %s673
      %679 = dma.vmem_to_hbm [thread:$0]  %s674, 128, %s6, [#allocation5], 64, 64, 4
    $region41: #{tpu_custom_call.1} parent=1 // pred_fallthru
      _
    // Predicated region
    $region42: #{tpu_custom_call.1} parent=1 // pred_check
      _
    $region43: #{tpu_custom_call.1} parent=1 // pred_check_branch
      %681 = sbr.rel (0) target = $region45
    $region44: #{tpu_custom_call.1} parent=1 // pred_region
      %682 = dma.done [#allocation5], 128
    $region45: #{tpu_custom_call.1} parent=1 // pred_fallthru
      _
    %683 = vsyncpa [#allocation4], 1
    %684 = vsyncpa [#allocation7], 1
    %685 = vsyncpa [#allocation5], 1

</llo_original>
